<compile_context>
chip_gen: v6e
topology: v6e:2x2x1
jax: 0.10.0
libtpu: 0.0.40
codegen_flags: <defaults>
</compile_context>

<pallas_src>
import functools

import jax
import jax.numpy as jnp
from jax import lax
from jax.experimental import pallas as pl
from jax.experimental.pallas import tpu as pltpu


def _attention_kernel(x_ref, wqkv_ref, wo_ref, o_ref, acc_ref, *,
                      heads, dim_head):
    inner = heads * dim_head

    x = x_ref[0].astype(jnp.bfloat16)    # (N, D) -- only per-step cast left
    wqkv = wqkv_ref[...]                 # (D, 3*inner) bf16, scale folded into q cols
    wo = wo_ref[...]                     # (inner, D)   bf16

    # Fused QKV projection: one lane-dense MXU matmul, f32 accumulation.
    qkv = jnp.dot(x, wqkv, preferred_element_type=jnp.float32)   # (N, 3*inner)
    # One dense cast of the whole slab instead of 3*H narrow per-head casts.
    qkv = qkv.astype(jnp.bfloat16)

    q = qkv[:, 0 * inner:1 * inner]      # scale already folded in (host side)
    k = qkv[:, 1 * inner:2 * inner]
    v = qkv[:, 2 * inner:3 * inner]

    # Per-head attention; heads is static -> trace-time unrolled loop.
    for h in range(heads):
        sl = slice(h * dim_head, (h + 1) * dim_head)
        qh = q[:, sl]                    # (N, Dh) bf16
        kh = k[:, sl]                    # (N, Dh) bf16
        vh = v[:, sl]                    # (N, Dh) bf16

        # scores = qh @ kh^T (contract Dh of both; avoids explicit transpose)
        dots = lax.dot_general(qh, kh, (((1,), (1,)), ((), ())),
                               preferred_element_type=jnp.float32)   # (N, N)

        # Stable softmax numerator in f32; normalization is DEFERRED to the
        # (N, Dh) head output (N*Dh multiplies instead of N*N).
        m = jnp.max(dots, axis=-1, keepdims=True)
        e = jnp.exp(dots - m)                                        # in (0, 1]
        s = jnp.sum(e, axis=-1, keepdims=True)                       # (N, 1)

        oh = jnp.dot(e.astype(jnp.bfloat16), vh,
                     preferred_element_type=jnp.float32)             # (N, Dh)
        oh = oh * pl.reciprocal(s, approx=True)                      # EUP recip

        # VMEM scratch store: bounds live ranges, replaces register concat.
        acc_ref[:, sl] = oh.astype(jnp.bfloat16)

    # Output projection over all heads at once, written straight to o_ref.
    o_ref[0] = jnp.dot(acc_ref[...], wo,
                       preferred_element_type=jnp.float32).astype(o_ref.dtype)


def prepare_weights(to_qkv_w, to_out_w, *, heads, dim_head, scale):
    """Host-side, once: transpose to x@W layout, fold the softmax scale into
    the q columns only, and cast to bf16."""
    inner = heads * dim_head
    w_qkv = jnp.asarray(to_qkv_w).T                    # (D, 3*inner)
    w_qkv = w_qkv.at[:, :inner].multiply(scale)        # scale only the q block
    w_out = jnp.asarray(to_out_w).T                    # (inner, D)
    return w_qkv.astype(jnp.bfloat16), w_out.astype(jnp.bfloat16)


def attention_forward(x, w_qkv, w_out, *, heads, dim_head):
    """x: (B, N, D) f32; w_qkv: (D, 3*H*Dh) bf16 (scale pre-folded into q cols);
    w_out: (H*Dh, D) bf16.  Use prepare_weights() to build the weight args."""
    B, N, D = x.shape
    inner = heads * dim_head
    assert w_qkv.shape == (D, 3 * inner) and w_qkv.dtype == jnp.bfloat16
    assert w_out.shape == (inner, D) and w_out.dtype == jnp.bfloat16

    kernel = functools.partial(_attention_kernel, heads=heads, dim_head=dim_head)

    return pl.pallas_call(
        kernel,
        out_shape=jax.ShapeDtypeStruct((B, N, D), x.dtype),
        grid_spec=pltpu.PrefetchScalarGridSpec(
            num_scalar_prefetch=0,
            grid=(B,),
            in_specs=[
                # x: one (N, D) tile per batch element
                pl.BlockSpec((1, N, D), lambda b: (b, 0, 0)),
                # weights: constant block index -> DMA'd once, VMEM-resident
                # for the whole grid (bf16 halves their footprint vs. before).
                pl.BlockSpec((D, 3 * inner), lambda b: (0, 0)),
                pl.BlockSpec((inner, D), lambda b: (0, 0)),
            ],
            out_specs=pl.BlockSpec((1, N, D), lambda b: (b, 0, 0)),
            # bf16 per-batch head-output accumulator (replaces register concat).
            scratch_shapes=[pltpu.VMEM((N, inner), jnp.bfloat16)],
        ),
        compiler_params=pltpu.CompilerParams(
            dimension_semantics=("parallel",)),
    )(x, w_qkv, w_out)


def attention_reference(x, w_qkv_f32, w_out_f32, *, heads, dim_head, scale):
    """Plain-JAX (f32) reference mirroring the PyTorch forward."""
    B, N, D = x.shape
    inner = heads * dim_head
    qkv = x @ w_qkv_f32                                    # (B, N, 3*inner)
    q, k, v = jnp.split(qkv, 3, axis=-1)

    def to_heads(t):                                       # 'b n (h d) -> b h n d'
        return t.reshape(B, N, heads, dim_head).transpose(0, 2, 1, 3)

    q, k, v = map(to_heads, (q, k, v))
    dots = jnp.einsum("bhqd,bhkd->bhqk", q, k) * scale
    attn = jax.nn.softmax(dots, axis=-1)
    out = jnp.einsum("bhqk,bhkd->bhqd", attn, v)
    out = out.transpose(0, 2, 1, 3).reshape(B, N, inner)   # 'b h n d -> b n (h d)'
    return out @ w_out_f32


if __name__ == "__main__":
    # Small shapes consistent with the module: dim=32, heads=4, dim_head=16
    B, N, D = 2, 8, 32
    H, Dh = 4, 16
    inner_dim = H * Dh
    scale = Dh ** (-0.5)

    key = jax.random.PRNGKey(0)
    kx, kqkv, ko = jax.random.split(key, 3)

    x = jax.random.normal(kx, (B, N, D), dtype=jnp.float32)

    # PyTorch nn.Linear weight layouts: (out_features, in_features)
    to_qkv_w = jax.random.normal(kqkv, (3 * inner_dim, D), dtype=jnp.float32) * 0.05
    to_out_w = jax.random.normal(ko, (D, inner_dim), dtype=jnp.float32) * 0.05

    # Host-side, once: transpose + fold scale into q columns + cast to bf16.
    w_qkv_bf16, w_out_bf16 = prepare_weights(
        to_qkv_w, to_out_w, heads=H, dim_head=Dh, scale=scale)

    out = attention_forward(x, w_qkv_bf16, w_out_bf16, heads=H, dim_head=Dh)
    out = jax.block_until_ready(out)

    ref = attention_reference(x, to_qkv_w.T, to_out_w.T,
                              heads=H, dim_head=Dh, scale=scale)
    assert out.shape == (B, N, D)
    # bf16 MXU operands + approx reciprocal vs f32 reference -> loosened tolerance
    assert jnp.allclose(out, ref, atol=2e-2, rtol=2e-2), "mismatch vs reference"

    print("KERNEL_OK")
</pallas_src>

<mosaic_0001>
module attributes {stable_mosaic.version = 11 : i64} {
  func.func @_attention_kernel(%arg0: i32, %arg1: memref<1x8x32xf32, #tpu.memory_space<vmem>>, %arg2: memref<32x192xbf16, #tpu.memory_space<vmem>>, %arg3: memref<64x32xbf16, #tpu.memory_space<vmem>>, %arg4: memref<1x8x32xf32, #tpu.memory_space<vmem>>, %arg5: memref<8x64xbf16, #tpu.memory_space<vmem>>) attributes {dimension_semantics = [#tpu.dimension_semantics<parallel>], iteration_bounds = array<i64: 2>, scalar_prefetch = 0 : i64, scratch_operands = 1 : i64, tpu.core_type = #tpu.core_type<tc>, window_params = [{transform_indices = @transform_0, window_bounds = array<i64: 1, 8, 32>}, {pipeline_mode = #tpu.pipeline_mode<synchronous>, transform_indices = @transform_1, window_bounds = array<i64: 32, 192>}, {pipeline_mode = #tpu.pipeline_mode<synchronous>, transform_indices = @transform_2, window_bounds = array<i64: 64, 32>}, {transform_indices = @transform_3, window_bounds = array<i64: 1, 8, 32>}]} {
    %c0 = arith.constant 0 : index
    %c0_0 = arith.constant 0 : index
    %c0_1 = arith.constant 0 : index
    %0 = vector.load %arg1[%c0, %c0_0, %c0_1] : memref<1x8x32xf32, #tpu.memory_space<vmem>>, vector<1x8x32xf32>
    %1 = vector.shape_cast %0 : vector<1x8x32xf32> to vector<8x32xf32>
    %2 = arith.truncf %1 : vector<8x32xf32> to vector<8x32xbf16>
    %c0_2 = arith.constant 0 : index
    %c0_3 = arith.constant 0 : index
    %3 = vector.load %arg2[%c0_2, %c0_3] : memref<32x192xbf16, #tpu.memory_space<vmem>>, vector<32x192xbf16>
    %c0_4 = arith.constant 0 : index
    %c0_5 = arith.constant 0 : index
    %4 = vector.load %arg3[%c0_4, %c0_5] : memref<64x32xbf16, #tpu.memory_space<vmem>>, vector<64x32xbf16>
    %cst = arith.constant dense<0.000000e+00> : vector<8x192xf32>
    %5 = tpu.matmul %2, %3, %cst {dimension_numbers = #tpu.dot_dimension_numbers<[1], [0], [0], [1], [0, 0, 1, 1], [], []>} : vector<8x32xbf16>, vector<32x192xbf16>, vector<8x192xf32> -> vector<8x192xf32>
    %6 = arith.truncf %5 : vector<8x192xf32> to vector<8x192xbf16>
    %7 = vector.extract_strided_slice %6 {offsets = [0, 0], sizes = [8, 64], strides = [1, 1]} : vector<8x192xbf16> to vector<8x64xbf16>
    %8 = vector.extract_strided_slice %6 {offsets = [0, 64], sizes = [8, 64], strides = [1, 1]} : vector<8x192xbf16> to vector<8x64xbf16>
    %9 = vector.extract_strided_slice %6 {offsets = [0, 128], sizes = [8, 64], strides = [1, 1]} : vector<8x192xbf16> to vector<8x64xbf16>
    %10 = vector.extract_strided_slice %7 {offsets = [0, 0], sizes = [8, 16], strides = [1, 1]} : vector<8x64xbf16> to vector<8x16xbf16>
    %11 = vector.extract_strided_slice %8 {offsets = [0, 0], sizes = [8, 16], strides = [1, 1]} : vector<8x64xbf16> to vector<8x16xbf16>
    %12 = vector.extract_strided_slice %9 {offsets = [0, 0], sizes = [8, 16], strides = [1, 1]} : vector<8x64xbf16> to vector<8x16xbf16>
    %cst_6 = arith.constant dense<0.000000e+00> : vector<8x8xf32>
    %13 = tpu.matmul %10, %11, %cst_6 {dimension_numbers = #tpu.dot_dimension_numbers<[1], [1], [0], [0], [0, 0, 1, 0], [], []>} : vector<8x16xbf16>, vector<8x16xbf16>, vector<8x8xf32> -> vector<8x8xf32>
    %cst_7 = arith.constant dense<0xFF800000> : vector<8xf32>
    %14 = vector.multi_reduction <maximumf>, %13, %cst_7 [1] : vector<8x8xf32> to vector<8xf32>
    %15 = vector.shape_cast %14 : vector<8xf32> to vector<8x1xf32>
    %16 = vector.broadcast %15 : vector<8x1xf32> to vector<8x8xf32>
    %17 = arith.subf %13, %16 : vector<8x8xf32>
    %18 = math.exp %17 : vector<8x8xf32>
    %cst_8 = arith.constant dense<0.000000e+00> : vector<8xf32>
    %19 = vector.multi_reduction <add>, %18, %cst_8 [1] : vector<8x8xf32> to vector<8xf32>
    %20 = vector.shape_cast %19 : vector<8xf32> to vector<8x1xf32>
    %21 = arith.truncf %18 : vector<8x8xf32> to vector<8x8xbf16>
    %cst_9 = arith.constant dense<0.000000e+00> : vector<8x16xf32>
    %22 = tpu.matmul %21, %12, %cst_9 {dimension_numbers = #tpu.dot_dimension_numbers<[1], [0], [0], [1], [0, 0, 1, 1], [], []>} : vector<8x8xbf16>, vector<8x16xbf16>, vector<8x16xf32> -> vector<8x16xf32>
    %23 = tpu.reciprocal %20 {approx = true} : vector<8x1xf32> -> vector<8x1xf32>
    %24 = vector.broadcast %23 : vector<8x1xf32> to vector<8x16xf32>
    %25 = arith.mulf %22, %24 : vector<8x16xf32>
    %26 = arith.truncf %25 : vector<8x16xf32> to vector<8x16xbf16>
    %c0_10 = arith.constant 0 : index
    %c0_11 = arith.constant 0 : index
    %27 = vector.load %arg5[%c0_10, %c0_11] : memref<8x64xbf16, #tpu.memory_space<vmem>>, vector<8x16xbf16>
    tpu.vector_store %arg5[%c0_10, %c0_11], %26 {strides = array<i32>} : memref<8x64xbf16, #tpu.memory_space<vmem>>, vector<8x16xbf16>,
    %28 = vector.extract_strided_slice %7 {offsets = [0, 16], sizes = [8, 16], strides = [1, 1]} : vector<8x64xbf16> to vector<8x16xbf16>
    %29 = vector.extract_strided_slice %8 {offsets = [0, 16], sizes = [8, 16], strides = [1, 1]} : vector<8x64xbf16> to vector<8x16xbf16>
    %30 = vector.extract_strided_slice %9 {offsets = [0, 16], sizes = [8, 16], strides = [1, 1]} : vector<8x64xbf16> to vector<8x16xbf16>
    %cst_12 = arith.constant dense<0.000000e+00> : vector<8x8xf32>
    %31 = tpu.matmul %28, %29, %cst_12 {dimension_numbers = #tpu.dot_dimension_numbers<[1], [1], [0], [0], [0, 0, 1, 0], [], []>} : vector<8x16xbf16>, vector<8x16xbf16>, vector<8x8xf32> -> vector<8x8xf32>
    %cst_13 = arith.constant dense<0xFF800000> : vector<8xf32>
    %32 = vector.multi_reduction <maximumf>, %31, %cst_13 [1] : vector<8x8xf32> to vector<8xf32>
    %33 = vector.shape_cast %32 : vector<8xf32> to vector<8x1xf32>
    %34 = vector.broadcast %33 : vector<8x1xf32> to vector<8x8xf32>
    %35 = arith.subf %31, %34 : vector<8x8xf32>
    %36 = math.exp %35 : vector<8x8xf32>
    %cst_14 = arith.constant dense<0.000000e+00> : vector<8xf32>
    %37 = vector.multi_reduction <add>, %36, %cst_14 [1] : vector<8x8xf32> to vector<8xf32>
    %38 = vector.shape_cast %37 : vector<8xf32> to vector<8x1xf32>
    %39 = arith.truncf %36 : vector<8x8xf32> to vector<8x8xbf16>
    %cst_15 = arith.constant dense<0.000000e+00> : vector<8x16xf32>
    %40 = tpu.matmul %39, %30, %cst_15 {dimension_numbers = #tpu.dot_dimension_numbers<[1], [0], [0], [1], [0, 0, 1, 1], [], []>} : vector<8x8xbf16>, vector<8x16xbf16>, vector<8x16xf32> -> vector<8x16xf32>
    %41 = tpu.reciprocal %38 {approx = true} : vector<8x1xf32> -> vector<8x1xf32>
    %42 = vector.broadcast %41 : vector<8x1xf32> to vector<8x16xf32>
    %43 = arith.mulf %40, %42 : vector<8x16xf32>
    %44 = arith.truncf %43 : vector<8x16xf32> to vector<8x16xbf16>
    %c0_16 = arith.constant 0 : index
    %c16 = arith.constant 16 : index
    %45 = vector.load %arg5[%c0_16, %c16] : memref<8x64xbf16, #tpu.memory_space<vmem>>, vector<8x16xbf16>
    tpu.vector_store %arg5[%c0_16, %c16], %44 {strides = array<i32>} : memref<8x64xbf16, #tpu.memory_space<vmem>>, vector<8x16xbf16>,
    %46 = vector.extract_strided_slice %7 {offsets = [0, 32], sizes = [8, 16], strides = [1, 1]} : vector<8x64xbf16> to vector<8x16xbf16>
    %47 = vector.extract_strided_slice %8 {offsets = [0, 32], sizes = [8, 16], strides = [1, 1]} : vector<8x64xbf16> to vector<8x16xbf16>
    %48 = vector.extract_strided_slice %9 {offsets = [0, 32], sizes = [8, 16], strides = [1, 1]} : vector<8x64xbf16> to vector<8x16xbf16>
    %cst_17 = arith.constant dense<0.000000e+00> : vector<8x8xf32>
    %49 = tpu.matmul %46, %47, %cst_17 {dimension_numbers = #tpu.dot_dimension_numbers<[1], [1], [0], [0], [0, 0, 1, 0], [], []>} : vector<8x16xbf16>, vector<8x16xbf16>, vector<8x8xf32> -> vector<8x8xf32>
    %cst_18 = arith.constant dense<0xFF800000> : vector<8xf32>
    %50 = vector.multi_reduction <maximumf>, %49, %cst_18 [1] : vector<8x8xf32> to vector<8xf32>
    %51 = vector.shape_cast %50 : vector<8xf32> to vector<8x1xf32>
    %52 = vector.broadcast %51 : vector<8x1xf32> to vector<8x8xf32>
    %53 = arith.subf %49, %52 : vector<8x8xf32>
    %54 = math.exp %53 : vector<8x8xf32>
    %cst_19 = arith.constant dense<0.000000e+00> : vector<8xf32>
    %55 = vector.multi_reduction <add>, %54, %cst_19 [1] : vector<8x8xf32> to vector<8xf32>
    %56 = vector.shape_cast %55 : vector<8xf32> to vector<8x1xf32>
    %57 = arith.truncf %54 : vector<8x8xf32> to vector<8x8xbf16>
    %cst_20 = arith.constant dense<0.000000e+00> : vector<8x16xf32>
    %58 = tpu.matmul %57, %48, %cst_20 {dimension_numbers = #tpu.dot_dimension_numbers<[1], [0], [0], [1], [0, 0, 1, 1], [], []>} : vector<8x8xbf16>, vector<8x16xbf16>, vector<8x16xf32> -> vector<8x16xf32>
    %59 = tpu.reciprocal %56 {approx = true} : vector<8x1xf32> -> vector<8x1xf32>
    %60 = vector.broadcast %59 : vector<8x1xf32> to vector<8x16xf32>
    %61 = arith.mulf %58, %60 : vector<8x16xf32>
    %62 = arith.truncf %61 : vector<8x16xf32> to vector<8x16xbf16>
    %c0_21 = arith.constant 0 : index
    %c32 = arith.constant 32 : index
    %63 = vector.load %arg5[%c0_21, %c32] : memref<8x64xbf16, #tpu.memory_space<vmem>>, vector<8x16xbf16>
    tpu.vector_store %arg5[%c0_21, %c32], %62 {strides = array<i32>} : memref<8x64xbf16, #tpu.memory_space<vmem>>, vector<8x16xbf16>,
    %64 = vector.extract_strided_slice %7 {offsets = [0, 48], sizes = [8, 16], strides = [1, 1]} : vector<8x64xbf16> to vector<8x16xbf16>
    %65 = vector.extract_strided_slice %8 {offsets = [0, 48], sizes = [8, 16], strides = [1, 1]} : vector<8x64xbf16> to vector<8x16xbf16>
    %66 = vector.extract_strided_slice %9 {offsets = [0, 48], sizes = [8, 16], strides = [1, 1]} : vector<8x64xbf16> to vector<8x16xbf16>
    %cst_22 = arith.constant dense<0.000000e+00> : vector<8x8xf32>
    %67 = tpu.matmul %64, %65, %cst_22 {dimension_numbers = #tpu.dot_dimension_numbers<[1], [1], [0], [0], [0, 0, 1, 0], [], []>} : vector<8x16xbf16>, vector<8x16xbf16>, vector<8x8xf32> -> vector<8x8xf32>
    %cst_23 = arith.constant dense<0xFF800000> : vector<8xf32>
    %68 = vector.multi_reduction <maximumf>, %67, %cst_23 [1] : vector<8x8xf32> to vector<8xf32>
    %69 = vector.shape_cast %68 : vector<8xf32> to vector<8x1xf32>
    %70 = vector.broadcast %69 : vector<8x1xf32> to vector<8x8xf32>
    %71 = arith.subf %67, %70 : vector<8x8xf32>
    %72 = math.exp %71 : vector<8x8xf32>
    %cst_24 = arith.constant dense<0.000000e+00> : vector<8xf32>
    %73 = vector.multi_reduction <add>, %72, %cst_24 [1] : vector<8x8xf32> to vector<8xf32>
    %74 = vector.shape_cast %73 : vector<8xf32> to vector<8x1xf32>
    %75 = arith.truncf %72 : vector<8x8xf32> to vector<8x8xbf16>
    %cst_25 = arith.constant dense<0.000000e+00> : vector<8x16xf32>
    %76 = tpu.matmul %75, %66, %cst_25 {dimension_numbers = #tpu.dot_dimension_numbers<[1], [0], [0], [1], [0, 0, 1, 1], [], []>} : vector<8x8xbf16>, vector<8x16xbf16>, vector<8x16xf32> -> vector<8x16xf32>
    %77 = tpu.reciprocal %74 {approx = true} : vector<8x1xf32> -> vector<8x1xf32>
    %78 = vector.broadcast %77 : vector<8x1xf32> to vector<8x16xf32>
    %79 = arith.mulf %76, %78 : vector<8x16xf32>
    %80 = arith.truncf %79 : vector<8x16xf32> to vector<8x16xbf16>
    %c0_26 = arith.constant 0 : index
    %c48 = arith.constant 48 : index
    %81 = vector.load %arg5[%c0_26, %c48] : memref<8x64xbf16, #tpu.memory_space<vmem>>, vector<8x16xbf16>
    tpu.vector_store %arg5[%c0_26, %c48], %80 {strides = array<i32>} : memref<8x64xbf16, #tpu.memory_space<vmem>>, vector<8x16xbf16>,
    %c0_27 = arith.constant 0 : index
    %c0_28 = arith.constant 0 : index
    %82 = vector.load %arg5[%c0_27, %c0_28] : memref<8x64xbf16, #tpu.memory_space<vmem>>, vector<8x64xbf16>
    %cst_29 = arith.constant dense<0.000000e+00> : vector<8x32xf32>
    %83 = tpu.matmul %82, %4, %cst_29 {dimension_numbers = #tpu.dot_dimension_numbers<[1], [0], [0], [1], [0, 0, 1, 1], [], []>} : vector<8x64xbf16>, vector<64x32xbf16>, vector<8x32xf32> -> vector<8x32xf32>
    %c0_30 = arith.constant 0 : index
    %c0_31 = arith.constant 0 : index
    %c0_32 = arith.constant 0 : index
    %84 = vector.load %arg4[%c0_30, %c0_31, %c0_32] : memref<1x8x32xf32, #tpu.memory_space<vmem>>, vector<1x8x32xf32>
    %85 = vector.shape_cast %84 : vector<1x8x32xf32> to vector<8x32xf32>
    %86 = vector.shape_cast %83 : vector<8x32xf32> to vector<1x8x32xf32>
    tpu.vector_store %arg4[%c0_30, %c0_31, %c0_32], %86 {strides = array<i32>} : memref<1x8x32xf32, #tpu.memory_space<vmem>>, vector<1x8x32xf32>,
    return
  }
  func.func @transform_0(%arg0: i32) -> (i32, i32, i32) {
    %c0_i32 = arith.constant 0 : i32
    %c0_i32_0 = arith.constant 0 : i32
    %c0_i32_1 = arith.constant 0 : i32
    return %arg0, %c0_i32, %c0_i32_0 : i32, i32, i32
  }
  func.func @transform_1(%arg0: i32) -> (i32, i32) {
    %c0_i32 = arith.constant 0 : i32
    %c0_i32_0 = arith.constant 0 : i32
    %c0_i32_1 = arith.constant 0 : i32
    return %c0_i32, %c0_i32_0 : i32, i32
  }
  func.func @transform_2(%arg0: i32) -> (i32, i32) {
    %c0_i32 = arith.constant 0 : i32
    %c0_i32_0 = arith.constant 0 : i32
    %c0_i32_1 = arith.constant 0 : i32
    return %c0_i32, %c0_i32_0 : i32, i32
  }
  func.func @transform_3(%arg0: i32) -> (i32, i32, i32) {
    %c0_i32 = arith.constant 0 : i32
    %c0_i32_0 = arith.constant 0 : i32
    %c0_i32_1 = arith.constant 0 : i32
    return %arg0, %c0_i32, %c0_i32_0 : i32, i32, i32
  }
}

</mosaic_0001>

<llo_original>
// kernel: tpu_custom_call.1
$region0: #{tpu_custom_call.1}
  #allocation0 [shape = 'u32[]', space=smem, size = 0x4, offset = 0x4, fixed_abs, tag = 'smem constant byte address 0x4 - core index']
  #allocation1 [shape = 'u32[144,128]{1,0:T(1,128)}', space=vmem, size = 0x12000, scoped, tag = 'internal scratch']
  #allocation2 [shape = 'bf16[8,64]{1,0:T(8,128)(2,1)}', space=vmem, size = 0x800, scoped, tag = 'scratch operand']
  %s0 = inlined_call_operand.vmem [shape: f32[2,8,32], index: 0, kind: input, shape index: {}]
  %s1 = inlined_call_operand.vmem [shape: bf16[32,192], index: 1, kind: input, shape index: {}]
  %s2 = inlined_call_operand.vmem [shape: bf16[64,32], index: 2, kind: input, shape index: {}]
  %s3 = inlined_call_operand.hbm [shape: f32[2,8,32], index: 3, kind: output, shape index: {}]
  %s4 = sld [smem:[#allocation0]]
  $region45: #{tpu_custom_call.1} parent=0
    _
  %s6 = ssub.s32 1, %s4
  %s7 = scalar_select 0, %s6, %s4
  $region1: #{tpu_custom_call.1} parent=0
    #allocation3 [shape = 'u8[8192]{0}', space=vmem, size = 0x2000, scoped, tag = 'output window, operand 0']
    #allocation4 [shape = 's32[2]{0}', space=sflag, size = 0x8, scoped, tag = 'scoped memory for tpu_custom_call.1']
    %8 = vsyncpa [#allocation4], 0
    %s9 = scalar_lea.sflag [#allocation4], 1
    %10 = vsyncpa %s9, 0
    loop: start=0, step=1, limit=4
    $region2: #{tpu_custom_call.1} parent=1 // loop_pre_header
      _
    $region3: #{tpu_custom_call.1} parent=1 // loop_header
      %s12 = sphi 0, %s16
      %p13 = scmp.ge.s32.totalorder %s12, 4
      %s22 = sphi 0, %s24
      %s25 = sphi 0, %s22
      %s26 = sphi 0, %s25
      %s42 = sphi 0, %s26
      %s46 = sphi 0, %s46
      %s48 = sphi 0, %s46
      %s49 = sphi 0, %s48
      %s63 = sphi 0, %s49
      %s67 = sphi 0, %s67
      %s69 = sphi 0, %s67
      %s70 = sphi 0, %s69
      %s84 = sphi 0, %s70
      %s90 = sphi 0, %s92
      %s93 = sphi 0, %s90
      %s94 = sphi 0, %s93
      %s110 = sphi 0, %s94
    $region4: #{tpu_custom_call.1} parent=1 // loop_header_branch
      %15 = sbr.rel (%p13) target = $region8
    $region5: #{tpu_custom_call.1} parent=1 // loop_body
      %s17 = ssub.s32 %s12, 1
      %s18 = ssub.s32 %s12, 2
      %s19 = sadd.s32 %s12, 1
      %s20 = ssub.s32 %s12, %s19
      %p21 = scmp.eq.s32.totalorder %s20, 0
      %s23 = sadd.s32 %s22, 1
      %s24 = scalar_select %p21, %s22, %s23
      %p27 = pneg %p21
      %p28 = scmp.eq.s32.totalorder %s12, 1
      %p29 = por %p27, %p28
      %p30 = scmp.ne.s32.totalorder %s22, %s25
      %p31 = scmp.eq.s32.totalorder %s12, 0
      %p32 = por %p30, %p31
      %p33 = scmp.ne.s32.totalorder %s22, %s25
      %p34 = scmp.eq.s32.totalorder %s17, 1
      %p35 = por %p33, %p34
      %p36 = scmp.ne.s32.totalorder %s25, %s26
      %p37 = scmp.eq.s32.totalorder %s17, 0
      %p38 = por %p36, %p37
      %p39 = scmp.ne.s32.totalorder %s25, %s26
      %p40 = scmp.eq.s32.totalorder %s18, 1
      %p41 = por %p39, %p40
      %p43 = scmp.ne.s32.totalorder %s26, %s42
      %p44 = scmp.eq.s32.totalorder %s18, 0
      %p45 = por %p43, %p44
      %s47 = sadd.s32 %s46, 1
      %p50 = scmp.eq.s32.totalorder %s12, 1
      %p51 = scmp.ne.s32.totalorder %s46, %s48
      %p52 = scmp.eq.s32.totalorder %s12, 0
      %p53 = por %p51, %p52
      %p54 = scmp.ne.s32.totalorder %s46, %s48
      %p55 = scmp.eq.s32.totalorder %s17, 1
      %p56 = por %p54, %p55
      %p57 = scmp.ne.s32.totalorder %s48, %s49
      %p58 = scmp.eq.s32.totalorder %s17, 0
      %p59 = por %p57, %p58
      %p60 = scmp.ne.s32.totalorder %s48, %s49
      %p61 = scmp.eq.s32.totalorder %s18, 1
      %p62 = por %p60, %p61
      %p64 = scmp.ne.s32.totalorder %s49, %s63
      %p65 = scmp.eq.s32.totalorder %s18, 0
      %p66 = por %p64, %p65
      %s68 = sadd.s32 %s67, 1
      %p71 = scmp.eq.s32.totalorder %s12, 1
      %p72 = scmp.ne.s32.totalorder %s67, %s69
      %p73 = scmp.eq.s32.totalorder %s12, 0
      %p74 = por %p72, %p73
      %p75 = scmp.ne.s32.totalorder %s67, %s69
      %p76 = scmp.eq.s32.totalorder %s17, 1
      %p77 = por %p75, %p76
      %p78 = scmp.ne.s32.totalorder %s69, %s70
      %p79 = scmp.eq.s32.totalorder %s17, 0
      %p80 = por %p78, %p79
      %p81 = scmp.ne.s32.totalorder %s69, %s70
      %p82 = scmp.eq.s32.totalorder %s18, 1
      %p83 = por %p81, %p82
      %p85 = scmp.ne.s32.totalorder %s70, %s84
      %p86 = scmp.eq.s32.totalorder %s18, 0
      %p87 = por %p85, %p86
      %s88 = ssub.s32 %s12, %s19
      %p89 = scmp.eq.s32.totalorder %s88, 0
      %s91 = sadd.s32 %s90, 1
      %s92 = scalar_select %p89, %s90, %s91
      %p95 = pneg %p89
      %p96 = scmp.eq.s32.totalorder %s12, 1
      %p97 = por %p95, %p96
      %p98 = scmp.ne.s32.totalorder %s90, %s93
      %p99 = scmp.eq.s32.totalorder %s12, 0
      %p100 = por %p98, %p99
      %p101 = scmp.ne.s32.totalorder %s90, %s93
      %p102 = scmp.eq.s32.totalorder %s17, 1
      %p103 = por %p101, %p102
      %p104 = scmp.ne.s32.totalorder %s93, %s94
      %p105 = scmp.eq.s32.totalorder %s17, 0
      %p106 = por %p104, %p105
      %p107 = scmp.ne.s32.totalorder %s93, %s94
      %p108 = scmp.eq.s32.totalorder %s18, 1
      %p109 = por %p107, %p108
      %p111 = scmp.ne.s32.totalorder %s94, %s110
      %p112 = scmp.eq.s32.totalorder %s18, 0
      %p113 = por %p111, %p112
      %p114 = scmp.le.s32.totalorder 1, %s12
      %p115 = scmp.lt.s32.totalorder %s12, 3
      %p116 = pnand %p114, %p115
      %p117 = pneg %p116
      // Predicated region
      $region9: #{tpu_custom_call.1} parent=5 // pred_check
        _
      $region10: #{tpu_custom_call.1} parent=5 // pred_check_branch
        %119 = sbr.rel (%p116) target = $region12
      $region11: #{tpu_custom_call.1} parent=5 // pred_region
        %s120 = ssub.s32 %s12, 1
        // Predicated region
        $region13: #{tpu_custom_call.1} parent=11 // pred_check
          %p121 = pneg %p59
        $region14: #{tpu_custom_call.1} parent=11 // pred_check_branch
          %123 = sbr.rel (%p121) target = $region16
        $region15: #{tpu_custom_call.1} parent=11 // pred_region
          _
        $region16: #{tpu_custom_call.1} parent=11 // pred_fallthru
          _
        // Predicated region
        $region17: #{tpu_custom_call.1} parent=11 // pred_check
          %p124 = pneg %p80
        $region18: #{tpu_custom_call.1} parent=11 // pred_check_branch
          %126 = sbr.rel (%p124) target = $region20
        $region19: #{tpu_custom_call.1} parent=11 // pred_region
          _
        $region20: #{tpu_custom_call.1} parent=11 // pred_fallthru
          _
      $region12: #{tpu_custom_call.1} parent=5 // pred_fallthru
        _
      %p127 = scmp.lt.s32.totalorder %s12, 2
      // Predicated region
      $region21: #{tpu_custom_call.1} parent=5 // pred_check
        %p128 = pneg %p127
      $region22: #{tpu_custom_call.1} parent=5 // pred_check_branch
        %130 = sbr.rel (%p128) target = $region24
      $region23: #{tpu_custom_call.1} parent=5 // pred_region
        // Predicated region
        $region25: #{tpu_custom_call.1} parent=23 // pred_check
          %p131 = pneg %p32
        $region26: #{tpu_custom_call.1} parent=23 // pred_check_branch
          %133 = sbr.rel (%p131) target = $region28
        $region27: #{tpu_custom_call.1} parent=23 // pred_region
          %p134 = scmp.lt.s32.totalorder %s12, 1
          %s135 = scalar_select %p134, %s12, 1
          %s136 = smul.addr %s135, 8
          %s137 = scalar_lea.vmem %s0, %s136
        $region28: #{tpu_custom_call.1} parent=23 // pred_fallthru
          _
      $region24: #{tpu_custom_call.1} parent=5 // pred_fallthru
        _
      %p138 = scmp.le.s32.totalorder 1, %s12
      %p139 = scmp.lt.s32.totalorder %s12, 3
      %p140 = pnand %p138, %p139
      %p141 = pneg %p140
      // Predicated region
      $region29: #{tpu_custom_call.1} parent=5 // pred_check
        _
      $region30: #{tpu_custom_call.1} parent=5 // pred_check_branch
        %143 = sbr.rel (%p140) target = $region32
      $region31: #{tpu_custom_call.1} parent=5 // pred_region
        %s144 = ssub.s32 %s12, 1
        %p145 = scmp.lt.s32.totalorder %s17, 1
        %s146 = scalar_select %p145, %s17, 1
        %s147 = smul.addr %s146, 8
        %s148 = scalar_lea.vmem %s0, %s147
        %p149 = pneg %p38
        %p150 = pneg %p35
        %p151 = pneg %p59
        %p152 = pneg %p56
        %p153 = pneg %p80
        %p154 = pneg %p77
        %p155 = pneg %p106
        %p156 = pneg %p103
        %s157 = sand.u32 %s93, 1
        %s158 = scalar_lea.sflag [#allocation4], %s157
        %s159 = sand.u32 %s93, 1
        %s160 = smul.addr %s159, 8
        %s161 = scalar_lea.vmem [#allocation3], %s160
        %p162 = scmp.lt.s32.totalorder %s17, 1
        %s163 = scalar_select %p162, %s17, 1
        %s164 = smul.addr %s163, 8
        %s165 = scalar_lea.vmem %s0, %s164
        %v167 = vld [vmem:[%s165] sm:$0xff]
        %v168 = vpack.c.bf16 %v167, %v167
        %v169 = vld [vmem:[%s1] sm:$0xff]
        %v170 = vld [vmem:[%s1 + $0x8] sm:$0xff]
        %v171 = vld [vmem:[%s1 + $0x10] sm:$0xff]
        %v172 = vld [vmem:[%s1 + $0x18] sm:$0xff]
        %v173 = vld [vmem:[%s2] sm:$0xf]
        %v174 = vld [vmem:[%s2 + $0x4] sm:$0xf]
        %v175 = vld [vmem:[%s2 + $0x8] sm:$0xf]
        %v176 = vld [vmem:[%s2 + $0xc] sm:$0xf]
        %v177 = vld [vmem:[%s2 + $0x10] sm:$0xf]
        %v178 = vld [vmem:[%s2 + $0x14] sm:$0xf]
        %v179 = vld [vmem:[%s2 + $0x18] sm:$0xf]
        %v180 = vld [vmem:[%s2 + $0x1c] sm:$0xf]
        %v185 = vunpack.c.l.b16 %v169
        %v186 = vunpack.c.h.b16 %v169
        %v187 = vunpack.c.l.b16 %v170
        %v188 = vunpack.c.h.b16 %v170
        %v189 = vunpack.c.l.b16 %v171
        %v190 = vunpack.c.h.b16 %v171
        %v191 = vunpack.c.l.b16 %v172
        %v192 = vunpack.c.h.b16 %v172
        %v193 = vpack.c.b16 %v187, %v185
        %v194 = vpack.c.b16 %v188, %v186
        %v195 = vpack.c.b16 %v191, %v189
        %v196 = vpack.c.b16 %v192, %v190
        %vm201 = vcmask 261120
        %v203 = vsel %vm201, %v168, 0
        %205 = vmatprep.subr.bf16.mxu0 0
        %206 = vmatpush1.bf16.msra.mxu0 0
        %207 = vmatprep.subr.bf16.mxu0 0
        %208 = vmatpush1.bf16.msra.mxu0 0
        %209 = vmatprep.subr.bf16.mxu0 0
        %210 = vmatpush1.bf16.msra.mxu0 0
        %211 = vmatprep.subr.bf16.mxu0 0
        %212 = vmatpush1.bf16.msra.mxu0 0
        %213 = vmatprep.subr.bf16.mxu0 0
        %214 = vmatpush1.bf16.msra.mxu0 0
        %215 = vmatprep.subr.bf16.mxu0 0
        %216 = vmatpush1.bf16.msra.mxu0 0
        %217 = vmatprep.subr.bf16.mxu0 %v196
        %218 = vmatpush1.bf16.msra.mxu0 %v195
        %219 = vmatprep.subr.bf16.mxu0 %v194
        %220 = vmatpush1.bf16.msra.mxu0 %v193
        %221 = vmatprep.subr.bf16.mxu0 0
        %222 = vmatpush2.bf16.msra.mxu0 0
        %223 = vmatprep.subr.bf16.mxu0 0
        %224 = vmatpush2.bf16.msra.mxu0 0
        %225 = vmatprep.subr.bf16.mxu0 0
        %226 = vmatpush2.bf16.msra.mxu0 0
        %227 = vmatprep.subr.bf16.mxu0 0
        %228 = vmatpush2.bf16.msra.mxu0 0
        %229 = vmatprep.subr.bf16.mxu0 0
        %230 = vmatpush2.bf16.msra.mxu0 0
        %231 = vmatprep.subr.bf16.mxu0 0
        %232 = vmatpush2.bf16.msra.mxu0 0
        %233 = vmatprep.subr.bf16.mxu0 0
        %234 = vmatpush2.bf16.msra.mxu0 0
        %235 = vmatprep.subr.bf16.mxu0 0
        %236 = vmatpush2.bf16.msra.mxu0 0
        %237 = vmatprep.mubr.bf16.mxu0 0
        %238 = vmatmul.mubr.bf16.gmra.mxu0 %v203
        %v239 = vpop.f32.mrf.mxu0
        %v240 = vadd.f32 0.0, %v239
        %v241 = vpop.f32.mrf.mxu0
        %v242 = vadd.f32 0.0, %v241
        %v243 = vpop.f32.mrf.mxu0
        %v244 = vpop.f32.mrf.mxu0
        %245 = vdwg.mxu0
        %v246 = vpack.c.bf16 %v240, %v240
        %v247 = vpack.c.bf16 %v242, %v242
        %249 = vrot.lane.b32.xlu0 %v246, 64
        %v250 = vpop.permute.xlu0 %249
        %vm251 = vcmask 130048
        %v253 = vsel %vm251, %v246, 0
        %v256 = vsel %vm251, %v250, 0
        %258 = vmatprep.subr.bf16.mxu0 0
        %259 = vmatpush1.bf16.xpose.msra.mxu0 0
        %260 = vmatprep.subr.bf16.mxu0 0
        %261 = vmatpush1.bf16.xpose.msra.mxu0 0
        %262 = vmatprep.subr.bf16.mxu0 0
        %263 = vmatpush1.bf16.xpose.msra.mxu0 0
        %264 = vmatprep.subr.bf16.mxu0 0
        %265 = vmatpush1.bf16.xpose.msra.mxu0 0
        %266 = vmatprep.subr.bf16.mxu0 0
        %267 = vmatpush1.bf16.xpose.msra.mxu0 0
        %268 = vmatprep.subr.bf16.mxu0 0
        %269 = vmatpush1.bf16.xpose.msra.mxu0 0
        %270 = vmatprep.subr.bf16.mxu0 0
        %271 = vmatpush1.bf16.xpose.msra.mxu0 0
        %272 = vmatprep.subr.bf16.mxu0 0
        %273 = vmatpush1.bf16.xpose.msra.mxu0 %v256
        %274 = vmatprep.subr.bf16.mxu0 0
        %275 = vmatpush2.bf16.xpose.msra.mxu0 0
        %276 = vmatprep.subr.bf16.mxu0 0
        %277 = vmatpush2.bf16.xpose.msra.mxu0 0
        %278 = vmatprep.subr.bf16.mxu0 0
        %279 = vmatpush2.bf16.xpose.msra.mxu0 0
        %280 = vmatprep.subr.bf16.mxu0 0
        %281 = vmatpush2.bf16.xpose.msra.mxu0 0
        %282 = vmatprep.subr.bf16.mxu0 0
        %283 = vmatpush2.bf16.xpose.msra.mxu0 0
        %284 = vmatprep.subr.bf16.mxu0 0
        %285 = vmatpush2.bf16.xpose.msra.mxu0 0
        %286 = vmatprep.subr.bf16.mxu0 0
        %287 = vmatpush2.bf16.xpose.msra.mxu0 0
        %288 = vmatprep.subr.bf16.mxu0 0
        %289 = vmatpush2.bf16.xpose.msra.mxu0 0
        %290 = vmatprep.mubr.bf16.mxu0 0
        %291 = vmatmul.mubr.bf16.gmra.mxu0 %v253
        %v292 = vpop.f32.mrf.mxu0
        %v293 = vadd.f32 0.0, %v292
        %v294 = vpop.f32.mrf.mxu0
        %v295 = vpop.f32.mrf.mxu0
        %v296 = vpop.f32.mrf.mxu0
        %297 = vdwg.mxu0
        %vm298 = vcmask 64512
        %v299 = vsel %vm298, %v293, -inf
        %300 = vmax.xlane.f32.xlu0 %v299
        %v301 = vpop.xlane.xlu0 %300
        %v302 = vsub.f32 %v293, %v301
        %v303 = vmul.f32 %v302, 1.442695
        %v304 = vpow.pop %v303
        %v305 = vsel %vm298, %v304, 0.0
        %306 = vadd.xlane.f32.xlu0 %v305
        %v307 = vpop.xlane.xlu0 %306
        %v308 = vpack.c.bf16 %v304, %v304
        %v310 = vsel %vm298, %v308, 0
        %vm312 = vcmask 1043456
        %v314 = vsel %vm312, %v247, 0
        %316 = vmatprep.subr.bf16.mxu0 0
        %317 = vmatpush1.bf16.msra.mxu0 0
        %318 = vmatprep.subr.bf16.mxu0 0
        %319 = vmatpush1.bf16.msra.mxu0 0
        %320 = vmatprep.subr.bf16.mxu0 0
        %321 = vmatpush1.bf16.msra.mxu0 0
        %322 = vmatprep.subr.bf16.mxu0 0
        %323 = vmatpush1.bf16.msra.mxu0 0
        %324 = vmatprep.subr.bf16.mxu0 0
        %325 = vmatpush1.bf16.msra.mxu0 0
        %326 = vmatprep.subr.bf16.mxu0 0
        %327 = vmatpush1.bf16.msra.mxu0 0
        %328 = vmatprep.subr.bf16.mxu0 0
        %329 = vmatpush1.bf16.msra.mxu0 0
        %330 = vmatprep.subr.bf16.mxu0 0
        %331 = vmatpush1.bf16.msra.mxu0 %v314
        %332 = vmatprep.subr.bf16.mxu0 0
        %333 = vmatpush2.bf16.msra.mxu0 0
        %334 = vmatprep.subr.bf16.mxu0 0
        %335 = vmatpush2.bf16.msra.mxu0 0
        %336 = vmatprep.subr.bf16.mxu0 0
        %337 = vmatpush2.bf16.msra.mxu0 0
        %338 = vmatprep.subr.bf16.mxu0 0
        %339 = vmatpush2.bf16.msra.mxu0 0
        %340 = vmatprep.subr.bf16.mxu0 0
        %341 = vmatpush2.bf16.msra.mxu0 0
        %342 = vmatprep.subr.bf16.mxu0 0
        %343 = vmatpush2.bf16.msra.mxu0 0
        %344 = vmatprep.subr.bf16.mxu0 0
        %345 = vmatpush2.bf16.msra.mxu0 0
        %346 = vmatprep.subr.bf16.mxu0 0
        %347 = vmatpush2.bf16.msra.mxu0 0
        %348 = vmatprep.mubr.bf16.mxu0 0
        %349 = vmatmul.mubr.bf16.gmra.mxu0 %v310
        %v350 = vpop.f32.mrf.mxu0
        %v351 = vadd.f32 0.0, %v350
        %v352 = vpop.f32.mrf.mxu0
        %v353 = vpop.f32.mrf.mxu0
        %v354 = vpop.f32.mrf.mxu0
        %355 = vdwg.mxu0
        %v356 = vrcp.pop %v307
        %v357 = vmul.f32 %v351, %v356
        %v358 = vpack.c.bf16 %v357, %v357
        %vm359 = vcmask 125952
        %360 = vst.msk [vmem:[#allocation2] sm:$0xf] %vm359, %v358
        %361 = vrot.lane.b32.xlu0 %v246, 112
        %v362 = vpop.permute.xlu0 %361
        %363 = vrot.lane.b32.xlu0 %v246, 48
        %v364 = vpop.permute.xlu0 %363
        %v366 = vsel %vm251, %v362, 0
        %v369 = vsel %vm251, %v364, 0
        %371 = vmatprep.subr.bf16.mxu0 0
        %372 = vmatpush1.bf16.xpose.msra.mxu0 0
        %373 = vmatprep.subr.bf16.mxu0 0
        %374 = vmatpush1.bf16.xpose.msra.mxu0 0
        %375 = vmatprep.subr.bf16.mxu0 0
        %376 = vmatpush1.bf16.xpose.msra.mxu0 0
        %377 = vmatprep.subr.bf16.mxu0 0
        %378 = vmatpush1.bf16.xpose.msra.mxu0 0
        %379 = vmatprep.subr.bf16.mxu0 0
        %380 = vmatpush1.bf16.xpose.msra.mxu0 0
        %381 = vmatprep.subr.bf16.mxu0 0
        %382 = vmatpush1.bf16.xpose.msra.mxu0 0
        %383 = vmatprep.subr.bf16.mxu0 0
        %384 = vmatpush1.bf16.xpose.msra.mxu0 0
        %385 = vmatprep.subr.bf16.mxu0 0
        %386 = vmatpush1.bf16.xpose.msra.mxu0 %v369
        %387 = vmatprep.subr.bf16.mxu0 0
        %388 = vmatpush2.bf16.xpose.msra.mxu0 0
        %389 = vmatprep.subr.bf16.mxu0 0
        %390 = vmatpush2.bf16.xpose.msra.mxu0 0
        %391 = vmatprep.subr.bf16.mxu0 0
        %392 = vmatpush2.bf16.xpose.msra.mxu0 0
        %393 = vmatprep.subr.bf16.mxu0 0
        %394 = vmatpush2.bf16.xpose.msra.mxu0 0
        %395 = vmatprep.subr.bf16.mxu0 0
        %396 = vmatpush2.bf16.xpose.msra.mxu0 0
        %397 = vmatprep.subr.bf16.mxu0 0
        %398 = vmatpush2.bf16.xpose.msra.mxu0 0
        %399 = vmatprep.subr.bf16.mxu0 0
        %400 = vmatpush2.bf16.xpose.msra.mxu0 0
        %401 = vmatprep.subr.bf16.mxu0 0
        %402 = vmatpush2.bf16.xpose.msra.mxu0 0
        %403 = vmatprep.mubr.bf16.mxu0 0
        %404 = vmatmul.mubr.bf16.gmra.mxu0 %v366
        %v405 = vpop.f32.mrf.mxu0
        %v406 = vadd.f32 0.0, %v405
        %v407 = vpop.f32.mrf.mxu0
        %v408 = vpop.f32.mrf.mxu0
        %v409 = vpop.f32.mrf.mxu0
        %410 = vdwg.mxu0
        %v411 = vsel %vm298, %v406, -inf
        %412 = vmax.xlane.f32.xlu0 %v411
        %v413 = vpop.xlane.xlu0 %412
        %v414 = vsub.f32 %v406, %v413
        %v415 = vmul.f32 %v414, 1.442695
        %v416 = vpow.pop %v415
        %v417 = vsel %vm298, %v416, 0.0
        %418 = vadd.xlane.f32.xlu0 %v417
        %v419 = vpop.xlane.xlu0 %418
        %v420 = vpack.c.bf16 %v416, %v416
        %422 = vrot.lane.b32.xlu0 %v247, 112
        %v423 = vpop.permute.xlu0 %422
        %v425 = vsel %vm298, %v420, 0
        %v428 = vsel %vm312, %v423, 0
        %430 = vmatprep.subr.bf16.mxu0 0
        %431 = vmatpush1.bf16.msra.mxu0 0
        %432 = vmatprep.subr.bf16.mxu0 0
        %433 = vmatpush1.bf16.msra.mxu0 0
        %434 = vmatprep.subr.bf16.mxu0 0
        %435 = vmatpush1.bf16.msra.mxu0 0
        %436 = vmatprep.subr.bf16.mxu0 0
        %437 = vmatpush1.bf16.msra.mxu0 0
        %438 = vmatprep.subr.bf16.mxu0 0
        %439 = vmatpush1.bf16.msra.mxu0 0
        %440 = vmatprep.subr.bf16.mxu0 0
        %441 = vmatpush1.bf16.msra.mxu0 0
        %442 = vmatprep.subr.bf16.mxu0 0
        %443 = vmatpush1.bf16.msra.mxu0 0
        %444 = vmatprep.subr.bf16.mxu0 0
        %445 = vmatpush1.bf16.msra.mxu0 %v428
        %446 = vmatprep.subr.bf16.mxu0 0
        %447 = vmatpush2.bf16.msra.mxu0 0
        %448 = vmatprep.subr.bf16.mxu0 0
        %449 = vmatpush2.bf16.msra.mxu0 0
        %450 = vmatprep.subr.bf16.mxu0 0
        %451 = vmatpush2.bf16.msra.mxu0 0
        %452 = vmatprep.subr.bf16.mxu0 0
        %453 = vmatpush2.bf16.msra.mxu0 0
        %454 = vmatprep.subr.bf16.mxu0 0
        %455 = vmatpush2.bf16.msra.mxu0 0
        %456 = vmatprep.subr.bf16.mxu0 0
        %457 = vmatpush2.bf16.msra.mxu0 0
        %458 = vmatprep.subr.bf16.mxu0 0
        %459 = vmatpush2.bf16.msra.mxu0 0
        %460 = vmatprep.subr.bf16.mxu0 0
        %461 = vmatpush2.bf16.msra.mxu0 0
        %462 = vmatprep.mubr.bf16.mxu0 0
        %463 = vmatmul.mubr.bf16.gmra.mxu0 %v425
        %v464 = vpop.f32.mrf.mxu0
        %v465 = vadd.f32 0.0, %v464
        %v466 = vpop.f32.mrf.mxu0
        %v467 = vpop.f32.mrf.mxu0
        %v468 = vpop.f32.mrf.mxu0
        %469 = vdwg.mxu0
        %v470 = vrcp.pop %v419
        %v471 = vmul.f32 %v465, %v470
        %v472 = vpack.c.bf16 %v471, %v471
        %v474 = vunpack.c.l.b16 %v472
        %v475 = vpack.c.b16 %v474, %v474
        %476 = vrot.lane.b32.xlu0 %v475, 16
        %v477 = vpop.permute.xlu0 %476
        %vm479 = vcmask 257152
        %480 = vst.msk [vmem:[#allocation2] sm:$0xf] %vm479, %v477
        %481 = vrot.lane.b32.xlu0 %v246, 96
        %v482 = vpop.permute.xlu0 %481
        %483 = vrot.lane.b32.xlu0 %v246, 32
        %v484 = vpop.permute.xlu0 %483
        %v486 = vsel %vm251, %v482, 0
        %v489 = vsel %vm251, %v484, 0
        %491 = vmatprep.subr.bf16.mxu0 0
        %492 = vmatpush1.bf16.xpose.msra.mxu0 0
        %493 = vmatprep.subr.bf16.mxu0 0
        %494 = vmatpush1.bf16.xpose.msra.mxu0 0
        %495 = vmatprep.subr.bf16.mxu0 0
        %496 = vmatpush1.bf16.xpose.msra.mxu0 0
        %497 = vmatprep.subr.bf16.mxu0 0
        %498 = vmatpush1.bf16.xpose.msra.mxu0 0
        %499 = vmatprep.subr.bf16.mxu0 0
        %500 = vmatpush1.bf16.xpose.msra.mxu0 0
        %501 = vmatprep.subr.bf16.mxu0 0
        %502 = vmatpush1.bf16.xpose.msra.mxu0 0
        %503 = vmatprep.subr.bf16.mxu0 0
        %504 = vmatpush1.bf16.xpose.msra.mxu0 0
        %505 = vmatprep.subr.bf16.mxu0 0
        %506 = vmatpush1.bf16.xpose.msra.mxu0 %v489
        %507 = vmatprep.subr.bf16.mxu0 0
        %508 = vmatpush2.bf16.xpose.msra.mxu0 0
        %509 = vmatprep.subr.bf16.mxu0 0
        %510 = vmatpush2.bf16.xpose.msra.mxu0 0
        %511 = vmatprep.subr.bf16.mxu0 0
        %512 = vmatpush2.bf16.xpose.msra.mxu0 0
        %513 = vmatprep.subr.bf16.mxu0 0
        %514 = vmatpush2.bf16.xpose.msra.mxu0 0
        %515 = vmatprep.subr.bf16.mxu0 0
        %516 = vmatpush2.bf16.xpose.msra.mxu0 0
        %517 = vmatprep.subr.bf16.mxu0 0
        %518 = vmatpush2.bf16.xpose.msra.mxu0 0
        %519 = vmatprep.subr.bf16.mxu0 0
        %520 = vmatpush2.bf16.xpose.msra.mxu0 0
        %521 = vmatprep.subr.bf16.mxu0 0
        %522 = vmatpush2.bf16.xpose.msra.mxu0 0
        %523 = vmatprep.mubr.bf16.mxu0 0
        %524 = vmatmul.mubr.bf16.gmra.mxu0 %v486
        %v525 = vpop.f32.mrf.mxu0
        %v526 = vadd.f32 0.0, %v525
        %v527 = vpop.f32.mrf.mxu0
        %v528 = vpop.f32.mrf.mxu0
        %v529 = vpop.f32.mrf.mxu0
        %530 = vdwg.mxu0
        %v531 = vsel %vm298, %v526, -inf
        %532 = vmax.xlane.f32.xlu0 %v531
        %v533 = vpop.xlane.xlu0 %532
        %v534 = vsub.f32 %v526, %v533
        %v535 = vmul.f32 %v534, 1.442695
        %v536 = vpow.pop %v535
        %v537 = vsel %vm298, %v536, 0.0
        %538 = vadd.xlane.f32.xlu0 %v537
        %v539 = vpop.xlane.xlu0 %538
        %v540 = vpack.c.bf16 %v536, %v536
        %541 = vrot.lane.b32.xlu0 %v247, 96
        %v542 = vpop.permute.xlu0 %541
        %v544 = vsel %vm298, %v540, 0
        %v547 = vsel %vm312, %v542, 0
        %549 = vmatprep.subr.bf16.mxu0 0
        %550 = vmatpush1.bf16.msra.mxu0 0
        %551 = vmatprep.subr.bf16.mxu0 0
        %552 = vmatpush1.bf16.msra.mxu0 0
        %553 = vmatprep.subr.bf16.mxu0 0
        %554 = vmatpush1.bf16.msra.mxu0 0
        %555 = vmatprep.subr.bf16.mxu0 0
        %556 = vmatpush1.bf16.msra.mxu0 0
        %557 = vmatprep.subr.bf16.mxu0 0
        %558 = vmatpush1.bf16.msra.mxu0 0
        %559 = vmatprep.subr.bf16.mxu0 0
        %560 = vmatpush1.bf16.msra.mxu0 0
        %561 = vmatprep.subr.bf16.mxu0 0
        %562 = vmatpush1.bf16.msra.mxu0 0
        %563 = vmatprep.subr.bf16.mxu0 0
        %564 = vmatpush1.bf16.msra.mxu0 %v547
        %565 = vmatprep.subr.bf16.mxu0 0
        %566 = vmatpush2.bf16.msra.mxu0 0
        %567 = vmatprep.subr.bf16.mxu0 0
        %568 = vmatpush2.bf16.msra.mxu0 0
        %569 = vmatprep.subr.bf16.mxu0 0
        %570 = vmatpush2.bf16.msra.mxu0 0
        %571 = vmatprep.subr.bf16.mxu0 0
        %572 = vmatpush2.bf16.msra.mxu0 0
        %573 = vmatprep.subr.bf16.mxu0 0
        %574 = vmatpush2.bf16.msra.mxu0 0
        %575 = vmatprep.subr.bf16.mxu0 0
        %576 = vmatpush2.bf16.msra.mxu0 0
        %577 = vmatprep.subr.bf16.mxu0 0
        %578 = vmatpush2.bf16.msra.mxu0 0
        %579 = vmatprep.subr.bf16.mxu0 0
        %580 = vmatpush2.bf16.msra.mxu0 0
        %581 = vmatprep.mubr.bf16.mxu0 0
        %582 = vmatmul.mubr.bf16.gmra.mxu0 %v544
        %v583 = vpop.f32.mrf.mxu0
        %v584 = vadd.f32 0.0, %v583
        %v585 = vpop.f32.mrf.mxu0
        %v586 = vpop.f32.mrf.mxu0
        %v587 = vpop.f32.mrf.mxu0
        %588 = vdwg.mxu0
        %v589 = vrcp.pop %v539
        %v590 = vmul.f32 %v584, %v589
        %v591 = vpack.c.bf16 %v590, %v590
        %v593 = vunpack.c.l.b16 %v591
        %v594 = vpack.c.b16 %v593, %v593
        %595 = vrot.lane.b32.xlu0 %v594, 32
        %v596 = vpop.permute.xlu0 %595
        %vm598 = vcmask 388352
        %599 = vst.msk [vmem:[#allocation2] sm:$0xf] %vm598, %v596
        %600 = vrot.lane.b32.xlu0 %v246, 80
        %v601 = vpop.permute.xlu0 %600
        %602 = vrot.lane.b32.xlu0 %v246, 16
        %v603 = vpop.permute.xlu0 %602
        %v605 = vsel %vm251, %v601, 0
        %v608 = vsel %vm251, %v603, 0
        %610 = vmatprep.subr.bf16.mxu0 0
        %611 = vmatpush1.bf16.xpose.msra.mxu0 0
        %612 = vmatprep.subr.bf16.mxu0 0
        %613 = vmatpush1.bf16.xpose.msra.mxu0 0
        %614 = vmatprep.subr.bf16.mxu0 0
        %615 = vmatpush1.bf16.xpose.msra.mxu0 0
        %616 = vmatprep.subr.bf16.mxu0 0
        %617 = vmatpush1.bf16.xpose.msra.mxu0 0
        %618 = vmatprep.subr.bf16.mxu0 0
        %619 = vmatpush1.bf16.xpose.msra.mxu0 0
        %620 = vmatprep.subr.bf16.mxu0 0
        %621 = vmatpush1.bf16.xpose.msra.mxu0 0
        %622 = vmatprep.subr.bf16.mxu0 0
        %623 = vmatpush1.bf16.xpose.msra.mxu0 0
        %624 = vmatprep.subr.bf16.mxu0 0
        %625 = vmatpush1.bf16.xpose.msra.mxu0 %v608
        %626 = vmatprep.subr.bf16.mxu0 0
        %627 = vmatpush2.bf16.xpose.msra.mxu0 0
        %628 = vmatprep.subr.bf16.mxu0 0
        %629 = vmatpush2.bf16.xpose.msra.mxu0 0
        %630 = vmatprep.subr.bf16.mxu0 0
        %631 = vmatpush2.bf16.xpose.msra.mxu0 0
        %632 = vmatprep.subr.bf16.mxu0 0
        %633 = vmatpush2.bf16.xpose.msra.mxu0 0
        %634 = vmatprep.subr.bf16.mxu0 0
        %635 = vmatpush2.bf16.xpose.msra.mxu0 0
        %636 = vmatprep.subr.bf16.mxu0 0
        %637 = vmatpush2.bf16.xpose.msra.mxu0 0
        %638 = vmatprep.subr.bf16.mxu0 0
        %639 = vmatpush2.bf16.xpose.msra.mxu0 0
        %640 = vmatprep.subr.bf16.mxu0 0
        %641 = vmatpush2.bf16.xpose.msra.mxu0 0
        %642 = vmatprep.mubr.bf16.mxu0 0
        %643 = vmatmul.mubr.bf16.gmra.mxu0 %v605
        %v644 = vpop.f32.mrf.mxu0
        %v645 = vadd.f32 0.0, %v644
        %v646 = vpop.f32.mrf.mxu0
        %v647 = vpop.f32.mrf.mxu0
        %v648 = vpop.f32.mrf.mxu0
        %649 = vdwg.mxu0
        %v650 = vsel %vm298, %v645, -inf
        %651 = vmax.xlane.f32.xlu0 %v650
        %v652 = vpop.xlane.xlu0 %651
        %v653 = vsub.f32 %v645, %v652
        %v654 = vmul.f32 %v653, 1.442695
        %v655 = vpow.pop %v654
        %v656 = vsel %vm298, %v655, 0.0
        %657 = vadd.xlane.f32.xlu0 %v656
        %v658 = vpop.xlane.xlu0 %657
        %v659 = vpack.c.bf16 %v655, %v655
        %660 = vrot.lane.b32.xlu0 %v247, 80
        %v661 = vpop.permute.xlu0 %660
        %v663 = vsel %vm298, %v659, 0
        %v666 = vsel %vm312, %v661, 0
        %668 = vmatprep.subr.bf16.mxu0 0
        %669 = vmatpush1.bf16.msra.mxu0 0
        %670 = vmatprep.subr.bf16.mxu0 0
        %671 = vmatpush1.bf16.msra.mxu0 0
        %672 = vmatprep.subr.bf16.mxu0 0
        %673 = vmatpush1.bf16.msra.mxu0 0
        %674 = vmatprep.subr.bf16.mxu0 0
        %675 = vmatpush1.bf16.msra.mxu0 0
        %676 = vmatprep.subr.bf16.mxu0 0
        %677 = vmatpush1.bf16.msra.mxu0 0
        %678 = vmatprep.subr.bf16.mxu0 0
        %679 = vmatpush1.bf16.msra.mxu0 0
        %680 = vmatprep.subr.bf16.mxu0 0
        %681 = vmatpush1.bf16.msra.mxu0 0
        %682 = vmatprep.subr.bf16.mxu0 0
        %683 = vmatpush1.bf16.msra.mxu0 %v666
        %684 = vmatprep.subr.bf16.mxu0 0
        %685 = vmatpush2.bf16.msra.mxu0 0
        %686 = vmatprep.subr.bf16.mxu0 0
        %687 = vmatpush2.bf16.msra.mxu0 0
        %688 = vmatprep.subr.bf16.mxu0 0
        %689 = vmatpush2.bf16.msra.mxu0 0
        %690 = vmatprep.subr.bf16.mxu0 0
        %691 = vmatpush2.bf16.msra.mxu0 0
        %692 = vmatprep.subr.bf16.mxu0 0
        %693 = vmatpush2.bf16.msra.mxu0 0
        %694 = vmatprep.subr.bf16.mxu0 0
        %695 = vmatpush2.bf16.msra.mxu0 0
        %696 = vmatprep.subr.bf16.mxu0 0
        %697 = vmatpush2.bf16.msra.mxu0 0
        %698 = vmatprep.subr.bf16.mxu0 0
        %699 = vmatpush2.bf16.msra.mxu0 0
        %700 = vmatprep.mubr.bf16.mxu0 0
        %701 = vmatmul.mubr.bf16.gmra.mxu0 %v663
        %v702 = vpop.f32.mrf.mxu0
        %v703 = vadd.f32 0.0, %v702
        %v704 = vpop.f32.mrf.mxu0
        %v705 = vpop.f32.mrf.mxu0
        %v706 = vpop.f32.mrf.mxu0
        %707 = vdwg.mxu0
        %v708 = vrcp.pop %v658
        %v709 = vmul.f32 %v703, %v708
        %v710 = vpack.c.bf16 %v709, %v709
        %v712 = vunpack.c.l.b16 %v710
        %v713 = vpack.c.b16 %v712, %v712
        %714 = vrot.lane.b32.xlu0 %v713, 48
        %v715 = vpop.permute.xlu0 %714
        %vm717 = vcmask 519552
        %718 = vst.msk [vmem:[#allocation2] sm:$0xf] %vm717, %v715
        %v719 = vld [vmem:[#allocation2] sm:$0xf]
        %v728 = vunpack.c.l.b16 %v173
        %v729 = vunpack.c.l.b16 %v174
        %v730 = vunpack.c.l.b16 %v175
        %v731 = vunpack.c.l.b16 %v176
        %v732 = vunpack.c.l.b16 %v177
        %v733 = vunpack.c.l.b16 %v178
        %v734 = vunpack.c.l.b16 %v179
        %v735 = vunpack.c.l.b16 %v180
        %v736 = vpack.c.b16 %v729, %v728
        %v737 = vpack.c.b16 %v731, %v730
        %v738 = vpack.c.b16 %v733, %v732
        %v739 = vpack.c.b16 %v735, %v734
        %vm744 = vcmask 523264
        %v746 = vsel %vm744, %v719, 0
        %748 = vmatprep.subr.bf16.mxu0 0
        %749 = vmatpush1.bf16.msra.mxu0 0
        %750 = vmatprep.subr.bf16.mxu0 0
        %751 = vmatpush1.bf16.msra.mxu0 0
        %752 = vmatprep.subr.bf16.mxu0 0
        %753 = vmatpush1.bf16.msra.mxu0 0
        %754 = vmatprep.subr.bf16.mxu0 0
        %755 = vmatpush1.bf16.msra.mxu0 0
        %756 = vmatprep.subr.bf16.mxu0 0
        %757 = vmatpush1.bf16.msra.mxu0 %v739
        %758 = vmatprep.subr.bf16.mxu0 0
        %759 = vmatpush1.bf16.msra.mxu0 %v738
        %760 = vmatprep.subr.bf16.mxu0 0
        %761 = vmatpush1.bf16.msra.mxu0 %v737
        %762 = vmatprep.subr.bf16.mxu0 0
        %763 = vmatpush1.bf16.msra.mxu0 %v736
        %764 = vmatprep.subr.bf16.mxu0 0
        %765 = vmatpush2.bf16.msra.mxu0 0
        %766 = vmatprep.subr.bf16.mxu0 0
        %767 = vmatpush2.bf16.msra.mxu0 0
        %768 = vmatprep.subr.bf16.mxu0 0
        %769 = vmatpush2.bf16.msra.mxu0 0
        %770 = vmatprep.subr.bf16.mxu0 0
        %771 = vmatpush2.bf16.msra.mxu0 0
        %772 = vmatprep.subr.bf16.mxu0 0
        %773 = vmatpush2.bf16.msra.mxu0 0
        %774 = vmatprep.subr.bf16.mxu0 0
        %775 = vmatpush2.bf16.msra.mxu0 0
        %776 = vmatprep.subr.bf16.mxu0 0
        %777 = vmatpush2.bf16.msra.mxu0 0
        %778 = vmatprep.subr.bf16.mxu0 0
        %779 = vmatpush2.bf16.msra.mxu0 0
        %780 = vmatprep.mubr.bf16.mxu0 0
        %781 = vmatmul.mubr.bf16.gmra.mxu0 %v746
        %v782 = vpop.f32.mrf.mxu0
        %v783 = vadd.f32 0.0, %v782
        %v784 = vpop.f32.mrf.mxu0
        %v785 = vpop.f32.mrf.mxu0
        %v786 = vpop.f32.mrf.mxu0
        %787 = vdwg.mxu0
        %788 = vst.msk [vmem:[%s161] sm:$0xff] %vm201, %v783
        %s789 = sand.u32 %s93, 1
        %s790 = scalar_lea.sflag [#allocation4], %s789
        %s791 = sand.u32 %s93, 1
        %s792 = smul.addr %s791, 8
        %s793 = scalar_lea.vmem [#allocation3], %s792
        // Predicated region
        $region33: #{tpu_custom_call.1} parent=31 // pred_check
          %p794 = pneg %p103
        $region34: #{tpu_custom_call.1} parent=31 // pred_check_branch
          %796 = sbr.rel (%p794) target = $region36
        $region35: #{tpu_custom_call.1} parent=31 // pred_region
          %s798 = ssub.s32 128, 128
          %799 = vsyncadd %s790, %s798
          %s800 = smul.addr %s17, 128
          %s801 = scalar_lea.hbm %s3, %s800
          %s803 = sshll.u32 %s793, 4
          %s804 = int_to_ptr.vmem [resolvable:$true] %s803
          %806 = dma.vmem_to_hbm [thread:$0]  %s804, 128, %s801, %s790
        $region36: #{tpu_custom_call.1} parent=31 // pred_fallthru
          _
      $region32: #{tpu_custom_call.1} parent=5 // pred_fallthru
        _
      %p807 = scmp.le.s32.totalorder 2, %s12
      // Predicated region
      $region37: #{tpu_custom_call.1} parent=5 // pred_check
        %p808 = pneg %p807
      $region38: #{tpu_custom_call.1} parent=5 // pred_check_branch
        %810 = sbr.rel (%p808) target = $region40
      $region39: #{tpu_custom_call.1} parent=5 // pred_region
        %s811 = ssub.s32 %s12, 2
        // Predicated region
        $region41: #{tpu_custom_call.1} parent=39 // pred_check
          %p812 = pneg %p109
        $region42: #{tpu_custom_call.1} parent=39 // pred_check_branch
          %814 = sbr.rel (%p812) target = $region44
        $region43: #{tpu_custom_call.1} parent=39 // pred_region
          %s815 = sand.u32 %s94, 1
          %s816 = scalar_lea.sflag [#allocation4], %s815
          %s817 = sand.u32 %s94, 1
          %s818 = smul.addr %s817, 8
          %s819 = scalar_lea.vmem [#allocation3], %s818
          %820 = dma.done %s816, 128
        $region44: #{tpu_custom_call.1} parent=39 // pred_fallthru
          _
      $region40: #{tpu_custom_call.1} parent=5 // pred_fallthru
        _
    $region6: #{tpu_custom_call.1} parent=1 // loop_footer
      %s16 = sadd.s32 1, %s12
    $region7: #{tpu_custom_call.1} parent=1 // loop_footer_branch
      %11 = sbr.rel target = $region3
    $region8: #{tpu_custom_call.1} parent=1 // loop_exit
      _
    %821 = vsyncpa [#allocation4], 1
    %s822 = scalar_lea.sflag [#allocation4], 1
    %823 = vsyncpa %s822, 1

</llo_original>
